<compile_context>
chip_gen: v6e
topology: v6e:2x2x1
jax: 0.10.0
libtpu: 0.0.40
codegen_flags: <defaults>
</compile_context>

<pallas_src>
import functools
import math

import jax
import jax.numpy as jnp
from jax import lax
from jax.experimental import pallas as pl
from jax.experimental.pallas import tpu as pltpu


def _nearest_embed_kernel(x_ref, embt_ref, hsq_ref, embg_ref, q_ref, idx_ref, *,
                          num_emb):
    # x_ref   : (1, D, TS)  input tile, compute dtype (channel-first)
    # embt_ref: (K, D)      codebook^T, compute dtype  (distance matmul, resident)
    # hsq_ref : (K, 1)      0.5 * ||e_k||^2, f32       (resident)
    # embg_ref: (D, K)      codebook, f32              (exact gather, resident)
    # q_ref   : (1, D, TS)  quantized output tile, x.dtype
    # idx_ref : (1, 1, TS)  argmin output tile, int32 (lane-dense)
    x = x_ref[0]                                                       # (D, TS)

    # argmin_k ||x - e_k||^2 == argmin_k (0.5*||e_k||^2 - <x, e_k>): the ||x||^2
    # term is constant per spatial position and drops out of the argmin.
    scores = jnp.dot(embt_ref[...], x,
                     preferred_element_type=jnp.float32)               # (K, TS)
    key = hsq_ref[...] - scores                                        # (K, TS)

    kk, ts = key.shape
    row = lax.broadcasted_iota(jnp.int32, (kk, ts), 0)                 # (K, TS)
    min_k = jnp.min(key, axis=0, keepdims=True)                        # (1, TS)
    # first-occurrence argmin (matches torch.min tie-breaking)
    idx = jnp.min(jnp.where(key <= min_k, row, num_emb), axis=0,
                  keepdims=True).astype(jnp.int32)                     # (1, TS)

    # Gather the selected codebook columns with ONE one-hot matmul per output
    # tile (MXU, channel-first result). f32 + HIGHEST precision keeps the
    # quantized values faithful codebook entries.
    onehot = (row == idx).astype(jnp.float32)                          # (K, TS)
    q = jnp.dot(embg_ref[...], onehot,
                precision=lax.Precision.HIGHEST,
                preferred_element_type=jnp.float32)                    # (D, TS)

    # NOTE: on a ragged last spatial tile the out-of-range lanes carry garbage
    # through all of the math above; Pallas masks them on the output store.
    q_ref[...] = q[None].astype(q_ref.dtype)
    idx_ref[...] = idx[None]


def _pick_tile_s(S, K, B, tile_s):
    """Spatial tile: multiple of 128 (or full S); (K,TS) f32 temps capped ~1 MiB."""
    cap = max(128, ((1 << 18) // max(K, 1)) // 128 * 128)
    ts = min(tile_s, cap)
    if S <= ts:
        ts = S
        if B == 1 and S >= 256:
            # keep >= 2 grid programs so a v7x megacore can split the work
            ts = max(128, ((S + 1) // 2 + 127) // 128 * 128)
    else:
        ts = max(128, (ts // 128) * 128)
    return ts


@functools.partial(jax.jit,
                   static_argnames=("tile_s", "use_bf16", "vmem_limit_bytes"))
def nearest_embed_forward(x, emb, *, tile_s=512, use_bf16=False,
                          vmem_limit_bytes=None):
    """PyTorch NearestEmbedFunc.forward.  x: (B, D, *spatial), emb: (D, K)."""
    if x.shape[1] != emb.shape[0]:
        raise ValueError("input.size(1) ({}) must be equal to emb.size(0) ({})"
                         .format(x.shape[1], emb.shape[0]))
    B, D = x.shape[0], x.shape[1]
    spatial = tuple(x.shape[2:])
    S = int(math.prod(spatial))                    # 1 if there are no spatial dims
    K = emb.shape[1]

    compute_dtype = jnp.bfloat16 if use_bf16 else x.dtype
    emb_f32 = emb.astype(jnp.float32)                               # (D, K) gather
    emb_t = jnp.swapaxes(emb_f32, 0, 1).astype(compute_dtype)       # (K, D) distance
    half_sq = (0.5 * jnp.sum(emb_f32 * emb_f32, axis=0))[:, None]   # (K, 1) f32

    # contiguous reshape only -- no moveaxis / HBM transpose round trips
    x3 = x.reshape(B, D, S).astype(compute_dtype)

    ts = _pick_tile_s(S, K, B, tile_s)
    grid = (B, pl.cdiv(S, ts))

    # Static VMEM budget: double-buffered blocks + (K, TS)-sized temporaries.
    ib = jnp.dtype(compute_dtype).itemsize
    ob = jnp.dtype(x.dtype).itemsize
    cb_bytes = K * D * (ib + 4) + K * 4                 # resident codebook arrays
    if cb_bytes > (40 << 20):
        # TODO(synk): add a K-chunked streaming path (argmin-only kernel + wrapper
        # gather) for codebooks that do not fit resident in VMEM (esp. v7x 64 MiB).
        raise NotImplementedError("codebook too large for the resident-VMEM path")
    blk = D * ts * (ib + ob) + ts * 4 + cb_bytes
    est = 2 * blk + 3 * K * ts * 4 + (2 << 20)
    vmem = vmem_limit_bytes
    if vmem is None and est > (24 << 20):
        vmem = min(est, 100 << 20)

    cp = dict(dimension_semantics=("parallel", "parallel"))
    if vmem is not None:
        cp["vmem_limit_bytes"] = int(vmem)

    q3, idx3 = pl.pallas_call(
        functools.partial(_nearest_embed_kernel, num_emb=K),
        out_shape=(
            jax.ShapeDtypeStruct((B, D, S), x.dtype),
            jax.ShapeDtypeStruct((B, 1, S), jnp.int32),
        ),
        grid_spec=pltpu.PrefetchScalarGridSpec(
            num_scalar_prefetch=0,
            grid=grid,
            in_specs=[
                pl.BlockSpec((1, D, ts), lambda b, s: (b, 0, s)),   # x tile
                pl.BlockSpec((K, D), lambda b, s: (0, 0)),          # emb^T (resident)
                pl.BlockSpec((K, 1), lambda b, s: (0, 0)),          # 0.5*||e||^2
                pl.BlockSpec((D, K), lambda b, s: (0, 0)),          # emb (gather)
            ],
            out_specs=[
                pl.BlockSpec((1, D, ts), lambda b, s: (b, 0, s)),   # quantized
                pl.BlockSpec((1, 1, ts), lambda b, s: (b, 0, s)),   # argmin (lane-dense)
            ],
        ),
        compiler_params=pltpu.CompilerParams(**cp),
    )(x3, emb_t, half_sq, emb_f32)

    quantized = q3.reshape((B, D) + spatial)
    argmin = idx3.reshape((B,) + spatial)
    return quantized, argmin


def _reference(x, emb):
    # pure-JAX reference of NearestEmbedFunc.forward
    B, D = x.shape[0], x.shape[1]
    spatial = tuple(x.shape[2:])
    x_flat = jnp.moveaxis(x, 1, -1).reshape(-1, D)                  # (N, D)
    dist = jnp.sqrt(jnp.sum((x_flat[:, :, None] - emb[None, :, :]) ** 2, axis=1))
    argmin = jnp.argmin(dist, axis=-1)                              # (N,)
    q = jnp.take(emb.T, argmin, axis=0)                             # (N, D)
    quantized = jnp.moveaxis(q.reshape((B,) + spatial + (D,)), -1, 1)
    return quantized, argmin.reshape((B,) + spatial).astype(jnp.int32)


if __name__ == "__main__":
    key = jax.random.PRNGKey(0)
    k_x, k_w = jax.random.split(key)

    B, D, H, W = 2, 4, 16, 16       # batch, emb_dim, spatial
    K = 8                           # num_embeddings

    x = jax.random.normal(k_x, (B, D, H, W), dtype=jnp.float32)
    # NearestEmbed.__init__: weight = torch.rand(embeddings_dim, num_embeddings)
    weight = jax.random.uniform(k_w, (D, K), dtype=jnp.float32)

    quantized, argmin = nearest_embed_forward(x, weight)
    jax.block_until_ready((quantized, argmin))

    q_ref, a_ref = _reference(x, weight)
    assert quantized.shape == (B, D, H, W) and argmin.shape == (B, H, W)
    assert quantized.dtype == x.dtype and argmin.dtype == jnp.int32

    # quantized must equal the codebook columns selected by the kernel's argmin
    q_sel = jnp.moveaxis(
        jnp.take(weight, argmin.reshape(-1), axis=1).reshape(D, B, H, W), 0, 1)
    assert bool(jnp.allclose(quantized, q_sel, atol=1e-5)), \
        "quantized does not match codebook[argmin]"

    # argmin must match the f32 reference except possibly at fp near-ties
    same = argmin == a_ref
    if not bool(jnp.all(same)):
        x_flat = jnp.moveaxis(x, 1, -1).reshape(-1, D)
        d2 = jnp.sum((x_flat[:, :, None] - weight[None, :, :]) ** 2, axis=1)
        d_k = jnp.take_along_axis(d2, argmin.reshape(-1, 1), axis=1)[:, 0]
        d_r = jnp.take_along_axis(d2, a_ref.reshape(-1, 1), axis=1)[:, 0]
        assert bool(jnp.all(jnp.abs(d_k - d_r) <= 1e-5 * (1.0 + d_r))), \
            "argmin mismatch vs reference (not a floating-point tie)"

    # quantized matches the reference wherever the argmin agrees
    m = same[:, None, :, :]
    assert bool(jnp.allclose(jnp.where(m, quantized, 0.0),
                             jnp.where(m, q_ref, 0.0), atol=1e-5)), \
        "quantized mismatch vs reference"

    print("KERNEL_OK")
</pallas_src>

<mosaic_0001>
module attributes {stable_mosaic.version = 11 : i64} {
  func.func @_nearest_embed_kernel(%arg0: i32, %arg1: i32, %arg2: memref<1x4x256xf32, #tpu.memory_space<vmem>>, %arg3: memref<8x4xf32, #tpu.memory_space<vmem>>, %arg4: memref<8x1xf32, #tpu.memory_space<vmem>>, %arg5: memref<4x8xf32, #tpu.memory_space<vmem>>, %arg6: memref<1x4x256xf32, #tpu.memory_space<vmem>>, %arg7: memref<1x1x256xi32, #tpu.memory_space<vmem>>) attributes {dimension_semantics = [#tpu.dimension_semantics<parallel>, #tpu.dimension_semantics<parallel>], iteration_bounds = array<i64: 2, 1>, scalar_prefetch = 0 : i64, scratch_operands = 0 : i64, tpu.core_type = #tpu.core_type<tc>, window_params = [{transform_indices = @transform_0, window_bounds = array<i64: 1, 4, 256>}, {pipeline_mode = #tpu.pipeline_mode<synchronous>, transform_indices = @transform_1, window_bounds = array<i64: 8, 4>}, {pipeline_mode = #tpu.pipeline_mode<synchronous>, transform_indices = @transform_2, window_bounds = array<i64: 8, 1>}, {pipeline_mode = #tpu.pipeline_mode<synchronous>, transform_indices = @transform_3, window_bounds = array<i64: 4, 8>}, {transform_indices = @transform_4, window_bounds = array<i64: 1, 4, 256>}, {transform_indices = @transform_5, window_bounds = array<i64: 1, 1, 256>}]} {
    %c0 = arith.constant 0 : index
    %c0_0 = arith.constant 0 : index
    %c0_1 = arith.constant 0 : index
    %0 = vector.load %arg2[%c0, %c0_0, %c0_1] : memref<1x4x256xf32, #tpu.memory_space<vmem>>, vector<1x4x256xf32>
    %1 = vector.shape_cast %0 : vector<1x4x256xf32> to vector<4x256xf32>
    %c0_2 = arith.constant 0 : index
    %c0_3 = arith.constant 0 : index
    %2 = vector.load %arg3[%c0_2, %c0_3] : memref<8x4xf32, #tpu.memory_space<vmem>>, vector<8x4xf32>
    %cst = arith.constant dense<0.000000e+00> : vector<8x256xf32>
    %3 = tpu.matmul %2, %1, %cst {dimension_numbers = #tpu.dot_dimension_numbers<[1], [0], [0], [1], [0, 0, 1, 1], [], []>} : vector<8x4xf32>, vector<4x256xf32>, vector<8x256xf32> -> vector<8x256xf32>
    %c0_4 = arith.constant 0 : index
    %c0_5 = arith.constant 0 : index
    %4 = vector.load %arg4[%c0_4, %c0_5] : memref<8x1xf32, #tpu.memory_space<vmem>>, vector<8x1xf32>
    %5 = vector.broadcast %4 : vector<8x1xf32> to vector<8x256xf32>
    %6 = arith.subf %5, %3 : vector<8x256xf32>
    %7 = tpu.iota {dimensions = array<i32: 0>} : vector<8x256xi32>
    %cst_6 = arith.constant dense<0x7F800000> : vector<256xf32>
    %8 = vector.multi_reduction <minimumf>, %6, %cst_6 [0] : vector<8x256xf32> to vector<256xf32>
    %9 = vector.shape_cast %8 : vector<256xf32> to vector<1x256xf32>
    %10 = vector.broadcast %9 : vector<1x256xf32> to vector<8x256xf32>
    %11 = arith.cmpf ole, %6, %10 : vector<8x256xf32>
    %c8_i32 = arith.constant 8 : i32
    %12 = vector.broadcast %c8_i32 : i32 to vector<8x256xi32>
    %13 = arith.select %11, %7, %12 : vector<8x256xi1>, vector<8x256xi32>
    %cst_7 = arith.constant dense<2147483647> : vector<256xi32>
    %14 = vector.multi_reduction <minsi>, %13, %cst_7 [0] : vector<8x256xi32> to vector<256xi32>
    %15 = vector.shape_cast %14 : vector<256xi32> to vector<1x256xi32>
    %16 = vector.broadcast %15 : vector<1x256xi32> to vector<8x256xi32>
    %17 = arith.cmpi eq, %7, %16 : vector<8x256xi32>
    %18 = arith.extui %17 : vector<8x256xi1> to vector<8x256xi32>
    %19 = arith.sitofp %18 : vector<8x256xi32> to vector<8x256xf32>
    %c0_8 = arith.constant 0 : index
    %c0_9 = arith.constant 0 : index
    %20 = vector.load %arg5[%c0_8, %c0_9] : memref<4x8xf32, #tpu.memory_space<vmem>>, vector<4x8xf32>
    %cst_10 = arith.constant dense<0.000000e+00> : vector<4x256xf32>
    %21 = tpu.matmul %20, %19, %cst_10 {dimension_numbers = #tpu.dot_dimension_numbers<[1], [0], [0], [1], [0, 0, 1, 1], [], []>, precision = #tpu.contract_precision<fp32>} : vector<4x8xf32>, vector<8x256xf32>, vector<4x256xf32> -> vector<4x256xf32>
    %22 = vector.shape_cast %21 : vector<4x256xf32> to vector<1x4x256xf32>
    %c0_11 = arith.constant 0 : index
    %c0_12 = arith.constant 0 : index
    %c0_13 = arith.constant 0 : index
    %23 = vector.load %arg6[%c0_11, %c0_12, %c0_13] : memref<1x4x256xf32, #tpu.memory_space<vmem>>, vector<1x4x256xf32>
    tpu.vector_store %arg6[%c0_11, %c0_12, %c0_13], %22 {strides = array<i32>} : memref<1x4x256xf32, #tpu.memory_space<vmem>>, vector<1x4x256xf32>,
    %24 = vector.shape_cast %15 : vector<1x256xi32> to vector<1x1x256xi32>
    %c0_14 = arith.constant 0 : index
    %c0_15 = arith.constant 0 : index
    %c0_16 = arith.constant 0 : index
    %25 = vector.load %arg7[%c0_14, %c0_15, %c0_16] : memref<1x1x256xi32, #tpu.memory_space<vmem>>, vector<1x1x256xi32>
    tpu.vector_store %arg7[%c0_14, %c0_15, %c0_16], %24 {strides = array<i32>} : memref<1x1x256xi32, #tpu.memory_space<vmem>>, vector<1x1x256xi32>,
    return
  }
  func.func @transform_0(%arg0: i32, %arg1: i32) -> (i32, i32, i32) {
    %c0_i32 = arith.constant 0 : i32
    %c0_i32_0 = arith.constant 0 : i32
    return %arg0, %c0_i32, %arg1 : i32, i32, i32
  }
  func.func @transform_1(%arg0: i32, %arg1: i32) -> (i32, i32) {
    %c0_i32 = arith.constant 0 : i32
    %c0_i32_0 = arith.constant 0 : i32
    %c0_i32_1 = arith.constant 0 : i32
    return %c0_i32, %c0_i32_0 : i32, i32
  }
  func.func @transform_2(%arg0: i32, %arg1: i32) -> (i32, i32) {
    %c0_i32 = arith.constant 0 : i32
    %c0_i32_0 = arith.constant 0 : i32
    %c0_i32_1 = arith.constant 0 : i32
    return %c0_i32, %c0_i32_0 : i32, i32
  }
  func.func @transform_3(%arg0: i32, %arg1: i32) -> (i32, i32) {
    %c0_i32 = arith.constant 0 : i32
    %c0_i32_0 = arith.constant 0 : i32
    %c0_i32_1 = arith.constant 0 : i32
    return %c0_i32, %c0_i32_0 : i32, i32
  }
  func.func @transform_4(%arg0: i32, %arg1: i32) -> (i32, i32, i32) {
    %c0_i32 = arith.constant 0 : i32
    %c0_i32_0 = arith.constant 0 : i32
    return %arg0, %c0_i32, %arg1 : i32, i32, i32
  }
  func.func @transform_5(%arg0: i32, %arg1: i32) -> (i32, i32, i32) {
    %c0_i32 = arith.constant 0 : i32
    %c0_i32_0 = arith.constant 0 : i32
    return %arg0, %c0_i32, %arg1 : i32, i32, i32
  }
}

</mosaic_0001>

<llo_original>
// kernel: nearest_embed_forward.1
$region0: #{nearest_embed_forward.1}
  #allocation0 [shape = 'u32[]', space=smem, size = 0x4, offset = 0x4, fixed_abs, tag = 'smem constant byte address 0x4 - core index']
  #allocation1 [shape = 'u32[144,128]{1,0:T(1,128)}', space=vmem, size = 0x12000, scoped, tag = 'internal scratch']
  %s0 = inlined_call_operand.vmem [shape: f32[2,4,256], index: 0, kind: input, shape index: {}]
  %s1 = inlined_call_operand.vmem [shape: f32[8,4], index: 1, kind: input, shape index: {}]
  %s2 = inlined_call_operand.vmem [shape: f32[8,1], index: 2, kind: input, shape index: {}]
  %s3 = inlined_call_operand.vmem [shape: f32[4,8], index: 3, kind: input, shape index: {}]
  %s4 = inlined_call_operand.vmem [shape: f32[2,4,256], index: 4, kind: output, shape index: {0}]
  %s5 = inlined_call_operand.vmem [shape: s32[2,1,256], index: 5, kind: output, shape index: {1}]
  %6 = xla_tuple %s4, %s5
  %s7 = sld [smem:[#allocation0]]
  $region57: #{nearest_embed_forward.1} parent=0
    _
  %s9 = ssub.s32 1, %s7
  %s10 = scalar_select 0, %s9, %s7
  loop: start=0, step=1, limit=4
  $region2: #{nearest_embed_forward.1} parent=0 // loop_pre_header
    _
  $region3: #{nearest_embed_forward.1} parent=0 // loop_header
    %s12 = sphi 0, %s16
    %p13 = scmp.ge.s32.totalorder %s12, 4
    %s19 = sphi 0, %s31
    %s20 = sphi 0, %s27
    %s21 = sphi 0, %s19
    %s22 = sphi 0, %s20
    %s23 = sphi 0, %s21
    %s24 = sphi 0, %s22
    %s36 = sphi 0, %s38
    %s39 = sphi 0, %s36
    %s40 = sphi 0, %s39
    %s56 = sphi 0, %s40
    %s60 = sphi 0, %s60
    %s62 = sphi 0, %s60
    %s63 = sphi 0, %s62
    %s77 = sphi 0, %s63
    %s81 = sphi 0, %s81
    %s83 = sphi 0, %s81
    %s84 = sphi 0, %s83
    %s98 = sphi 0, %s84
    %s102 = sphi 0, %s102
    %s104 = sphi 0, %s102
    %s105 = sphi 0, %s104
    %s119 = sphi 0, %s105
    %s127 = sphi 0, %s129
    %s130 = sphi 0, %s127
    %s131 = sphi 0, %s130
    %s147 = sphi 0, %s131
    %s155 = sphi 0, %s157
    %s158 = sphi 0, %s155
    %s159 = sphi 0, %s158
    %s175 = sphi 0, %s159
  $region4: #{nearest_embed_forward.1} parent=0 // loop_header_branch
    %15 = sbr.rel (%p13) target = $region8
  $region5: #{nearest_embed_forward.1} parent=0 // loop_body
    %s17 = ssub.s32 %s12, 1
    %s18 = ssub.s32 %s12, 2
    %s25 = sadd.s32 1, %s20
    %p26 = scmp.ge.s32.totalorder %s25, 1
    %s27 = scalar_select %p26, 0, %s25
    %s28 = sadd.s32 1, %s19
    %s29 = scalar_select %p26, %s28, %s19
    %p30 = scmp.ge.s32.totalorder %s29, 2
    %s31 = scalar_select %p30, 0, %s29
    %s32 = ssub.s32 %s19, %s31
    %s33 = ssub.s32 %s20, %s27
    %s34 = sor.u32 %s32, %s33
    %p35 = scmp.eq.s32.totalorder %s34, 0
    %s37 = sadd.s32 %s36, 1
    %s38 = scalar_select %p35, %s36, %s37
    %p41 = pneg %p35
    %p42 = scmp.eq.s32.totalorder %s12, 1
    %p43 = por %p41, %p42
    %p44 = scmp.ne.s32.totalorder %s36, %s39
    %p45 = scmp.eq.s32.totalorder %s12, 0
    %p46 = por %p44, %p45
    %p47 = scmp.ne.s32.totalorder %s36, %s39
    %p48 = scmp.eq.s32.totalorder %s17, 1
    %p49 = por %p47, %p48
    %p50 = scmp.ne.s32.totalorder %s39, %s40
    %p51 = scmp.eq.s32.totalorder %s17, 0
    %p52 = por %p50, %p51
    %p53 = scmp.ne.s32.totalorder %s39, %s40
    %p54 = scmp.eq.s32.totalorder %s18, 1
    %p55 = por %p53, %p54
    %p57 = scmp.ne.s32.totalorder %s40, %s56
    %p58 = scmp.eq.s32.totalorder %s18, 0
    %p59 = por %p57, %p58
    %s61 = sadd.s32 %s60, 1
    %p64 = scmp.eq.s32.totalorder %s12, 1
    %p65 = scmp.ne.s32.totalorder %s60, %s62
    %p66 = scmp.eq.s32.totalorder %s12, 0
    %p67 = por %p65, %p66
    %p68 = scmp.ne.s32.totalorder %s60, %s62
    %p69 = scmp.eq.s32.totalorder %s17, 1
    %p70 = por %p68, %p69
    %p71 = scmp.ne.s32.totalorder %s62, %s63
    %p72 = scmp.eq.s32.totalorder %s17, 0
    %p73 = por %p71, %p72
    %p74 = scmp.ne.s32.totalorder %s62, %s63
    %p75 = scmp.eq.s32.totalorder %s18, 1
    %p76 = por %p74, %p75
    %p78 = scmp.ne.s32.totalorder %s63, %s77
    %p79 = scmp.eq.s32.totalorder %s18, 0
    %p80 = por %p78, %p79
    %s82 = sadd.s32 %s81, 1
    %p85 = scmp.eq.s32.totalorder %s12, 1
    %p86 = scmp.ne.s32.totalorder %s81, %s83
    %p87 = scmp.eq.s32.totalorder %s12, 0
    %p88 = por %p86, %p87
    %p89 = scmp.ne.s32.totalorder %s81, %s83
    %p90 = scmp.eq.s32.totalorder %s17, 1
    %p91 = por %p89, %p90
    %p92 = scmp.ne.s32.totalorder %s83, %s84
    %p93 = scmp.eq.s32.totalorder %s17, 0
    %p94 = por %p92, %p93
    %p95 = scmp.ne.s32.totalorder %s83, %s84
    %p96 = scmp.eq.s32.totalorder %s18, 1
    %p97 = por %p95, %p96
    %p99 = scmp.ne.s32.totalorder %s84, %s98
    %p100 = scmp.eq.s32.totalorder %s18, 0
    %p101 = por %p99, %p100
    %s103 = sadd.s32 %s102, 1
    %p106 = scmp.eq.s32.totalorder %s12, 1
    %p107 = scmp.ne.s32.totalorder %s102, %s104
    %p108 = scmp.eq.s32.totalorder %s12, 0
    %p109 = por %p107, %p108
    %p110 = scmp.ne.s32.totalorder %s102, %s104
    %p111 = scmp.eq.s32.totalorder %s17, 1
    %p112 = por %p110, %p111
    %p113 = scmp.ne.s32.totalorder %s104, %s105
    %p114 = scmp.eq.s32.totalorder %s17, 0
    %p115 = por %p113, %p114
    %p116 = scmp.ne.s32.totalorder %s104, %s105
    %p117 = scmp.eq.s32.totalorder %s18, 1
    %p118 = por %p116, %p117
    %p120 = scmp.ne.s32.totalorder %s105, %s119
    %p121 = scmp.eq.s32.totalorder %s18, 0
    %p122 = por %p120, %p121
    %s123 = ssub.s32 %s19, %s31
    %s124 = ssub.s32 %s20, %s27
    %s125 = sor.u32 %s123, %s124
    %p126 = scmp.eq.s32.totalorder %s125, 0
    %s128 = sadd.s32 %s127, 1
    %s129 = scalar_select %p126, %s127, %s128
    %p132 = pneg %p126
    %p133 = scmp.eq.s32.totalorder %s12, 1
    %p134 = por %p132, %p133
    %p135 = scmp.ne.s32.totalorder %s127, %s130
    %p136 = scmp.eq.s32.totalorder %s12, 0
    %p137 = por %p135, %p136
    %p138 = scmp.ne.s32.totalorder %s127, %s130
    %p139 = scmp.eq.s32.totalorder %s17, 1
    %p140 = por %p138, %p139
    %p141 = scmp.ne.s32.totalorder %s130, %s131
    %p142 = scmp.eq.s32.totalorder %s17, 0
    %p143 = por %p141, %p142
    %p144 = scmp.ne.s32.totalorder %s130, %s131
    %p145 = scmp.eq.s32.totalorder %s18, 1
    %p146 = por %p144, %p145
    %p148 = scmp.ne.s32.totalorder %s131, %s147
    %p149 = scmp.eq.s32.totalorder %s18, 0
    %p150 = por %p148, %p149
    %s151 = ssub.s32 %s19, %s31
    %s152 = ssub.s32 %s20, %s27
    %s153 = sor.u32 %s151, %s152
    %p154 = scmp.eq.s32.totalorder %s153, 0
    %s156 = sadd.s32 %s155, 1
    %s157 = scalar_select %p154, %s155, %s156
    %p160 = pneg %p154
    %p161 = scmp.eq.s32.totalorder %s12, 1
    %p162 = por %p160, %p161
    %p163 = scmp.ne.s32.totalorder %s155, %s158
    %p164 = scmp.eq.s32.totalorder %s12, 0
    %p165 = por %p163, %p164
    %p166 = scmp.ne.s32.totalorder %s155, %s158
    %p167 = scmp.eq.s32.totalorder %s17, 1
    %p168 = por %p166, %p167
    %p169 = scmp.ne.s32.totalorder %s158, %s159
    %p170 = scmp.eq.s32.totalorder %s17, 0
    %p171 = por %p169, %p170
    %p172 = scmp.ne.s32.totalorder %s158, %s159
    %p173 = scmp.eq.s32.totalorder %s18, 1
    %p174 = por %p172, %p173
    %p176 = scmp.ne.s32.totalorder %s159, %s175
    %p177 = scmp.eq.s32.totalorder %s18, 0
    %p178 = por %p176, %p177
    %p179 = scmp.le.s32.totalorder 1, %s12
    %p180 = scmp.lt.s32.totalorder %s12, 3
    %p181 = pnand %p179, %p180
    %p182 = pneg %p181
    // Predicated region
    $region9: #{nearest_embed_forward.1} parent=5 // pred_check
      _
    $region10: #{nearest_embed_forward.1} parent=5 // pred_check_branch
      %184 = sbr.rel (%p181) target = $region12
    $region11: #{nearest_embed_forward.1} parent=5 // pred_region
      %s185 = ssub.s32 %s12, 1
      // Predicated region
      $region13: #{nearest_embed_forward.1} parent=11 // pred_check
        %p186 = pneg %p73
      $region14: #{nearest_embed_forward.1} parent=11 // pred_check_branch
        %188 = sbr.rel (%p186) target = $region16
      $region15: #{nearest_embed_forward.1} parent=11 // pred_region
        _
      $region16: #{nearest_embed_forward.1} parent=11 // pred_fallthru
        _
      // Predicated region
      $region17: #{nearest_embed_forward.1} parent=11 // pred_check
        %p189 = pneg %p94
      $region18: #{nearest_embed_forward.1} parent=11 // pred_check_branch
        %191 = sbr.rel (%p189) target = $region20
      $region19: #{nearest_embed_forward.1} parent=11 // pred_region
        _
      $region20: #{nearest_embed_forward.1} parent=11 // pred_fallthru
        _
      // Predicated region
      $region21: #{nearest_embed_forward.1} parent=11 // pred_check
        %p192 = pneg %p115
      $region22: #{nearest_embed_forward.1} parent=11 // pred_check_branch
        %194 = sbr.rel (%p192) target = $region24
      $region23: #{nearest_embed_forward.1} parent=11 // pred_region
        _
      $region24: #{nearest_embed_forward.1} parent=11 // pred_fallthru
        _
    $region12: #{nearest_embed_forward.1} parent=5 // pred_fallthru
      _
    %p195 = scmp.lt.s32.totalorder %s12, 2
    // Predicated region
    $region25: #{nearest_embed_forward.1} parent=5 // pred_check
      %p196 = pneg %p195
    $region26: #{nearest_embed_forward.1} parent=5 // pred_check_branch
      %198 = sbr.rel (%p196) target = $region28
    $region27: #{nearest_embed_forward.1} parent=5 // pred_region
      // Predicated region
      $region29: #{nearest_embed_forward.1} parent=27 // pred_check
        %p199 = pneg %p46
      $region30: #{nearest_embed_forward.1} parent=27 // pred_check_branch
        %201 = sbr.rel (%p199) target = $region32
      $region31: #{nearest_embed_forward.1} parent=27 // pred_region
        %s202 = smul.u32 2, %s20
        %p203 = scmp.lt.s32.totalorder %s19, 1
        %s204 = scalar_select %p203, %s19, 1
        %p205 = scmp.lt.s32.totalorder %s202, 1
        %s206 = scalar_select %p205, %s202, 1
        %s207 = smul.addr %s204, 2
        %s208 = sadd.s32 %s206, %s207
        %s209 = smul.addr %s208, 4
        %s210 = scalar_lea.vmem %s0, %s209
        %s211 = smul.u32 2, %s20
      $region32: #{nearest_embed_forward.1} parent=27 // pred_fallthru
        _
    $region28: #{nearest_embed_forward.1} parent=5 // pred_fallthru
      _
    %p212 = scmp.le.s32.totalorder 1, %s12
    %p213 = scmp.lt.s32.totalorder %s12, 3
    %p214 = pnand %p212, %p213
    %p215 = pneg %p214
    // Predicated region
    $region33: #{nearest_embed_forward.1} parent=5 // pred_check
      _
    $region34: #{nearest_embed_forward.1} parent=5 // pred_check_branch
      %217 = sbr.rel (%p214) target = $region36
    $region35: #{nearest_embed_forward.1} parent=5 // pred_region
      %s218 = ssub.s32 %s12, 1
      %s219 = smul.u32 2, %s22
      %p220 = scmp.lt.s32.totalorder %s21, 1
      %s221 = scalar_select %p220, %s21, 1
      %p222 = scmp.lt.s32.totalorder %s219, 1
      %s223 = scalar_select %p222, %s219, 1
      %s224 = smul.addr %s221, 2
      %s225 = sadd.s32 %s223, %s224
      %s226 = smul.addr %s225, 4
      %s227 = scalar_lea.vmem %s0, %s226
      %p228 = pneg %p52
      %p229 = pneg %p49
      %p230 = pneg %p73
      %p231 = pneg %p70
      %p232 = pneg %p94
      %p233 = pneg %p91
      %p234 = pneg %p115
      %p235 = pneg %p112
      %p236 = pneg %p143
      %p237 = pneg %p140
      %s238 = smul.u32 2, %s22
      %p239 = scmp.lt.s32.totalorder %s21, 1
      %s240 = scalar_select %p239, %s21, 1
      %p241 = scmp.lt.s32.totalorder %s238, 1
      %s242 = scalar_select %p241, %s238, 1
      %s243 = smul.addr %s240, 2
      %s244 = sadd.s32 %s242, %s243
      %s245 = smul.addr %s244, 4
      %s246 = scalar_lea.vmem %s4, %s245
      %p247 = pneg %p171
      %p248 = pneg %p168
      %s249 = smul.u32 2, %s22
      %p250 = scmp.lt.s32.totalorder %s21, 1
      %s251 = scalar_select %p250, %s21, 1
      %p252 = scmp.lt.s32.totalorder %s249, 1
      %s253 = scalar_select %p252, %s249, 1
      %s254 = smul.addr %s251, 2
      %s255 = sadd.s32 %s253, %s254
      %s256 = scalar_lea.vmem %s5, %s255
      %s257 = smul.u32 2, %s22
      %p258 = scmp.lt.s32.totalorder %s21, 1
      %s259 = scalar_select %p258, %s21, 1
      %p260 = scmp.lt.s32.totalorder %s257, 1
      %s261 = scalar_select %p260, %s257, 1
      %s262 = smul.addr %s259, 2
      %s263 = sadd.s32 %s261, %s262
      %s264 = smul.addr %s263, 4
      %s265 = scalar_lea.vmem %s0, %s264
      %s266 = smul.u32 2, %s22
      %s267 = smul.u32 2, %s22
      %p268 = scmp.lt.s32.totalorder %s21, 1
      %s269 = scalar_select %p268, %s21, 1
      %p270 = scmp.lt.s32.totalorder %s267, 1
      %s271 = scalar_select %p270, %s267, 1
      %s272 = smul.addr %s269, 2
      %s273 = sadd.s32 %s271, %s272
      %s274 = smul.addr %s273, 4
      %s275 = scalar_lea.vmem %s4, %s274
      %s276 = smul.u32 2, %s22
      %s277 = smul.u32 2, %s22
      %p278 = scmp.lt.s32.totalorder %s21, 1
      %s279 = scalar_select %p278, %s21, 1
      %p280 = scmp.lt.s32.totalorder %s277, 1
      %s281 = scalar_select %p280, %s277, 1
      %s282 = smul.addr %s279, 2
      %s283 = sadd.s32 %s281, %s282
      %s284 = scalar_lea.vmem %s5, %s283
      %s285 = smul.u32 2, %s22
      %v286 = vld [vmem:[%s265] sm:$0xff]
      %v287 = vld [vmem:[%s1] sm:$0xff]
      %v289 = vcombine.high %v286, %v286
      %vm290 = vcmask 31744
      %v292 = vsel %vm290, %v287, 0
      %vm294 = vcmask 1043456
      %v295 = vsel %vm294, %v286, 0
      %v297 = vsel %vm294, %v289, 0
      %299 = vmatprep.subr.mxu0 0.0
      %300 = vmatpush1.msra.mxu0 0.0
      %301 = vmatprep.subr.mxu0 0.0
      %302 = vmatpush1.msra.mxu0 0.0
      %303 = vmatprep.subr.mxu0 0.0
      %304 = vmatpush1.msra.mxu0 0.0
      %305 = vmatprep.subr.mxu0 0.0
      %306 = vmatpush1.msra.mxu0 0.0
      %307 = vmatprep.subr.mxu0 0.0
      %308 = vmatpush1.msra.mxu0 0.0
      %309 = vmatprep.subr.mxu0 0.0
      %310 = vmatpush1.msra.mxu0 0.0
      %311 = vmatprep.subr.mxu0 0.0
      %312 = vmatpush1.msra.mxu0 0.0
      %313 = vmatprep.subr.mxu0 0.0
      %314 = vmatpush1.msra.mxu0 0.0
      %315 = vmatprep.subr.mxu0 0.0
      %316 = vmatpush1.msra.mxu0 0.0
      %317 = vmatprep.subr.mxu0 0.0
      %318 = vmatpush1.msra.mxu0 0.0
      %319 = vmatprep.subr.mxu0 0.0
      %320 = vmatpush1.msra.mxu0 0.0
      %321 = vmatprep.subr.mxu0 0.0
      %322 = vmatpush1.msra.mxu0 0.0
      %323 = vmatprep.subr.mxu0 0.0
      %324 = vmatpush1.msra.mxu0 0.0
      %325 = vmatprep.subr.mxu0 0.0
      %326 = vmatpush1.msra.mxu0 0.0
      %327 = vmatprep.subr.mxu0 0.0
      %328 = vmatpush1.msra.mxu0 0.0
      %329 = vmatprep.subr.mxu0 %v297
      %330 = vmatpush1.msra.mxu0 %v295
      %331 = vmatprep.subr.mxu0 0.0
      %332 = vmatpush2.msra.mxu0 0.0
      %333 = vmatprep.subr.mxu0 0.0
      %334 = vmatpush2.msra.mxu0 0.0
      %335 = vmatprep.subr.mxu0 0.0
      %336 = vmatpush2.msra.mxu0 0.0
      %337 = vmatprep.subr.mxu0 0.0
      %338 = vmatpush2.msra.mxu0 0.0
      %339 = vmatprep.subr.mxu0 0.0
      %340 = vmatpush2.msra.mxu0 0.0
      %341 = vmatprep.subr.mxu0 0.0
      %342 = vmatpush2.msra.mxu0 0.0
      %343 = vmatprep.subr.mxu0 0.0
      %344 = vmatpush2.msra.mxu0 0.0
      %345 = vmatprep.subr.mxu0 0.0
      %346 = vmatpush2.msra.mxu0 0.0
      %347 = vmatprep.subr.mxu0 0.0
      %348 = vmatpush2.msra.mxu0 0.0
      %349 = vmatprep.subr.mxu0 0.0
      %350 = vmatpush2.msra.mxu0 0.0
      %351 = vmatprep.subr.mxu0 0.0
      %352 = vmatpush2.msra.mxu0 0.0
      %353 = vmatprep.subr.mxu0 0.0
      %354 = vmatpush2.msra.mxu0 0.0
      %355 = vmatprep.subr.mxu0 0.0
      %356 = vmatpush2.msra.mxu0 0.0
      %357 = vmatprep.subr.mxu0 0.0
      %358 = vmatpush2.msra.mxu0 0.0
      %359 = vmatprep.subr.mxu0 0.0
      %360 = vmatpush2.msra.mxu0 0.0
      %361 = vmatprep.subr.mxu0 0.0
      %362 = vmatpush2.msra.mxu0 0.0
      %363 = vmatprep.mubr.f32.mxu0 0.0
      %364 = vmatmul.mubr.f32.gmra.mxu0 %v292
      %v365 = vpop.f32.mrf.mxu0
      %v366 = vadd.f32 0.0, %v365
      %v367 = vpop.f32.mrf.mxu0
      %v368 = vadd.f32 0.0, %v367
      %369 = vdwg.mxu0
      %v370 = vld [vmem:[%s2] sm:$0xff]
      %372 = vset.pattern.permute.xlu0 0
      %373 = vperm.xlu0 %372, %v370
      %v374 = vpop.permute.xlu0 %373
      %v376 = vsub.f32 %v374, %v366
      %v377 = vsub.f32 %v374, %v368
      %v378 = vlaneseq
      %v379 = vshrl.u32 %v378, 7
      %v380 = vrot.slane %v376, 4
      %v381 = vmin.f32 %v376, %v380
      %v382 = vrot.slane %v381, 2
      %v383 = vmin.f32 %v381, %v382
      %v384 = vrot.slane %v383, 1
      %v385 = vmin.f32 %v383, %v384
      %v386 = vrot.slane %v377, 4
      %v387 = vmin.f32 %v377, %v386
      %v388 = vrot.slane %v387, 2
      %v389 = vmin.f32 %v387, %v388
      %v390 = vrot.slane %v389, 1
      %v391 = vmin.f32 %v389, %v390
      %vm392 = vcmp.le.f32.partialorder %v376, %v385
      %vm393 = vcmp.le.f32.partialorder %v377, %v391
      %v394 = vsel %vm392, %v379, 8
      %v395 = vsel %vm393, %v379, 8
      %v396 = vrot.slane %v394, 4
      %vm397 = vcmp.lt.s32.totalorder %v394, %v396
      %v398 = vsel %vm397, %v394, %v396
      %v399 = vrot.slane %v398, 2
      %vm400 = vcmp.lt.s32.totalorder %v398, %v399
      %v401 = vsel %vm400, %v398, %v399
      %v402 = vrot.slane %v401, 1
      %vm403 = vcmp.lt.s32.totalorder %v401, %v402
      %v404 = vsel %vm403, %v401, %v402
      %v405 = vrot.slane %v395, 4
      %vm406 = vcmp.lt.s32.totalorder %v395, %v405
      %v407 = vsel %vm406, %v395, %v405
      %v408 = vrot.slane %v407, 2
      %vm409 = vcmp.lt.s32.totalorder %v407, %v408
      %v410 = vsel %vm409, %v407, %v408
      %v411 = vrot.slane %v410, 1
      %vm412 = vcmp.lt.s32.totalorder %v410, %v411
      %v413 = vsel %vm412, %v410, %v411
      %vm414 = vcmp.eq.s32.totalorder %v379, %v404
      %vm415 = vcmp.eq.s32.totalorder %v379, %v413
      %v416 = vsel %vm414, 1, 0
      %v417 = vsel %vm415, 1, 0
      %v418 = vcvt.s32.f32 %v416
      %v419 = vcvt.s32.f32 %v417
      %v420 = vld [vmem:[%s3] sm:$0xf]
      %vm421 = vcmask 64512
      %v423 = vsel %vm421, %v420, 0
      %425 = vmatprep.subr.mxu0 0.0
      %426 = vmatpush1.msra.mxu0 0.0
      %427 = vmatprep.subr.mxu0 0.0
      %428 = vmatpush1.msra.mxu0 0.0
      %429 = vmatprep.subr.mxu0 0.0
      %430 = vmatpush1.msra.mxu0 0.0
      %431 = vmatprep.subr.mxu0 0.0
      %432 = vmatpush1.msra.mxu0 0.0
      %433 = vmatprep.subr.mxu0 0.0
      %434 = vmatpush1.msra.mxu0 0.0
      %435 = vmatprep.subr.mxu0 0.0
      %436 = vmatpush1.msra.mxu0 0.0
      %437 = vmatprep.subr.mxu0 0.0
      %438 = vmatpush1.msra.mxu0 0.0
      %439 = vmatprep.subr.mxu0 0.0
      %440 = vmatpush1.msra.mxu0 0.0
      %441 = vmatprep.subr.mxu0 0.0
      %442 = vmatpush1.msra.mxu0 0.0
      %443 = vmatprep.subr.mxu0 0.0
      %444 = vmatpush1.msra.mxu0 0.0
      %445 = vmatprep.subr.mxu0 0.0
      %446 = vmatpush1.msra.mxu0 0.0
      %447 = vmatprep.subr.mxu0 0.0
      %448 = vmatpush1.msra.mxu0 0.0
      %449 = vmatprep.subr.mxu0 0.0
      %450 = vmatpush1.msra.mxu0 0.0
      %451 = vmatprep.subr.mxu0 0.0
      %452 = vmatpush1.msra.mxu0 0.0
      %453 = vmatprep.subr.mxu0 0.0
      %454 = vmatpush1.msra.mxu0 0.0
      %v455 = vand.u32 %v419, 4294901760
      %456 = vmatprep.subr.mxu0 %v455
      %v457 = vand.u32 %v418, 4294901760
      %458 = vmatpush1.msra.mxu0 %v457
      %459 = vmatprep.subr.mxu0 0.0
      %460 = vmatpush2.msra.mxu0 0.0
      %461 = vmatprep.subr.mxu0 0.0
      %462 = vmatpush2.msra.mxu0 0.0
      %463 = vmatprep.subr.mxu0 0.0
      %464 = vmatpush2.msra.mxu0 0.0
      %465 = vmatprep.subr.mxu0 0.0
      %466 = vmatpush2.msra.mxu0 0.0
      %467 = vmatprep.subr.mxu0 0.0
      %468 = vmatpush2.msra.mxu0 0.0
      %469 = vmatprep.subr.mxu0 0.0
      %470 = vmatpush2.msra.mxu0 0.0
      %471 = vmatprep.subr.mxu0 0.0
      %472 = vmatpush2.msra.mxu0 0.0
      %473 = vmatprep.subr.mxu0 0.0
      %474 = vmatpush2.msra.mxu0 0.0
      %475 = vmatprep.subr.mxu0 0.0
      %476 = vmatpush2.msra.mxu0 0.0
      %477 = vmatprep.subr.mxu0 0.0
      %478 = vmatpush2.msra.mxu0 0.0
      %479 = vmatprep.subr.mxu0 0.0
      %480 = vmatpush2.msra.mxu0 0.0
      %481 = vmatprep.subr.mxu0 0.0
      %482 = vmatpush2.msra.mxu0 0.0
      %483 = vmatprep.subr.mxu0 0.0
      %484 = vmatpush2.msra.mxu0 0.0
      %485 = vmatprep.subr.mxu0 0.0
      %486 = vmatpush2.msra.mxu0 0.0
      %487 = vmatprep.subr.mxu0 0.0
      %488 = vmatpush2.msra.mxu0 0.0
      %489 = vmatprep.subr.mxu0 0.0
      %490 = vmatpush2.msra.mxu0 0.0
      %491 = vmatprep.mubr.f32.mxu0 0.0
      %v492 = vand.u32 %v423, 4294901760
      %v493 = vsub.f32 %v423, %v492
      %v494 = vand.u32 %v493, 4294901760
      %v495 = vsub.f32 %v493, %v494
      %v496 = vand.u32 %v495, 4294901760
      %497 = vmatmul.mubr.f32.gmra.mxu0 %v496
      %v498 = vpop.f32.mrf.mxu0
      %v499 = vadd.f32 0.0, %v498
      %v500 = vpop.f32.mrf.mxu0
      %v501 = vadd.f32 0.0, %v500
      %502 = vdwg.mxu0
      %503 = vmatprep.subr.mxu0 0.0
      %504 = vmatpush1.msra.mxu0 0.0
      %505 = vmatprep.subr.mxu0 0.0
      %506 = vmatpush1.msra.mxu0 0.0
      %507 = vmatprep.subr.mxu0 0.0
      %508 = vmatpush1.msra.mxu0 0.0
      %509 = vmatprep.subr.mxu0 0.0
      %510 = vmatpush1.msra.mxu0 0.0
      %511 = vmatprep.subr.mxu0 0.0
      %512 = vmatpush1.msra.mxu0 0.0
      %513 = vmatprep.subr.mxu0 0.0
      %514 = vmatpush1.msra.mxu0 0.0
      %515 = vmatprep.subr.mxu0 0.0
      %516 = vmatpush1.msra.mxu0 0.0
      %517 = vmatprep.subr.mxu0 0.0
      %518 = vmatpush1.msra.mxu0 0.0
      %519 = vmatprep.subr.mxu0 0.0
      %520 = vmatpush1.msra.mxu0 0.0
      %521 = vmatprep.subr.mxu0 0.0
      %522 = vmatpush1.msra.mxu0 0.0
      %523 = vmatprep.subr.mxu0 0.0
      %524 = vmatpush1.msra.mxu0 0.0
      %525 = vmatprep.subr.mxu0 0.0
      %526 = vmatpush1.msra.mxu0 0.0
      %527 = vmatprep.subr.mxu0 0.0
      %528 = vmatpush1.msra.mxu0 0.0
      %529 = vmatprep.subr.mxu0 0.0
      %530 = vmatpush1.msra.mxu0 0.0
      %531 = vmatprep.subr.mxu0 0.0
      %532 = vmatpush1.msra.mxu0 0.0
      %v533 = vand.u32 %v419, 4294901760
      %v534 = vsub.f32 %v419, %v533
      %v535 = vand.u32 %v534, 4294901760
      %v536 = vsub.f32 %v534, %v535
      %v537 = vand.u32 %v536, 4294901760
      %538 = vmatprep.subr.mxu0 %v537
      %v539 = vand.u32 %v418, 4294901760
      %v540 = vsub.f32 %v418, %v539
      %v541 = vand.u32 %v540, 4294901760
      %v542 = vsub.f32 %v540, %v541
      %v543 = vand.u32 %v542, 4294901760
      %544 = vmatpush1.msra.mxu0 %v543
      %545 = vmatprep.subr.mxu0 0.0
      %546 = vmatpush2.msra.mxu0 0.0
      %547 = vmatprep.subr.mxu0 0.0
      %548 = vmatpush2.msra.mxu0 0.0
      %549 = vmatprep.subr.mxu0 0.0
      %550 = vmatpush2.msra.mxu0 0.0
      %551 = vmatprep.subr.mxu0 0.0
      %552 = vmatpush2.msra.mxu0 0.0
      %553 = vmatprep.subr.mxu0 0.0
      %554 = vmatpush2.msra.mxu0 0.0
      %555 = vmatprep.subr.mxu0 0.0
      %556 = vmatpush2.msra.mxu0 0.0
      %557 = vmatprep.subr.mxu0 0.0
      %558 = vmatpush2.msra.mxu0 0.0
      %559 = vmatprep.subr.mxu0 0.0
      %560 = vmatpush2.msra.mxu0 0.0
      %561 = vmatprep.subr.mxu0 0.0
      %562 = vmatpush2.msra.mxu0 0.0
      %563 = vmatprep.subr.mxu0 0.0
      %564 = vmatpush2.msra.mxu0 0.0
      %565 = vmatprep.subr.mxu0 0.0
      %566 = vmatpush2.msra.mxu0 0.0
      %567 = vmatprep.subr.mxu0 0.0
      %568 = vmatpush2.msra.mxu0 0.0
      %569 = vmatprep.subr.mxu0 0.0
      %570 = vmatpush2.msra.mxu0 0.0
      %571 = vmatprep.subr.mxu0 0.0
      %572 = vmatpush2.msra.mxu0 0.0
      %573 = vmatprep.subr.mxu0 0.0
      %574 = vmatpush2.msra.mxu0 0.0
      %575 = vmatprep.subr.mxu0 0.0
      %576 = vmatpush2.msra.mxu0 0.0
      %577 = vmatprep.mubr.f32.mxu0 0.0
      %v578 = vand.u32 %v423, 4294901760
      %579 = vmatmul.mubr.f32.gmra.mxu0 %v578
      %v580 = vpop.f32.mrf.mxu0
      %v581 = vadd.f32 %v499, %v580
      %v582 = vpop.f32.mrf.mxu0
      %v583 = vadd.f32 %v501, %v582
      %584 = vdwg.mxu0
      %585 = vmatprep.subr.mxu0 0.0
      %586 = vmatpush1.msra.mxu0 0.0
      %587 = vmatprep.subr.mxu0 0.0
      %588 = vmatpush1.msra.mxu0 0.0
      %589 = vmatprep.subr.mxu0 0.0
      %590 = vmatpush1.msra.mxu0 0.0
      %591 = vmatprep.subr.mxu0 0.0
      %592 = vmatpush1.msra.mxu0 0.0
      %593 = vmatprep.subr.mxu0 0.0
      %594 = vmatpush1.msra.mxu0 0.0
      %595 = vmatprep.subr.mxu0 0.0
      %596 = vmatpush1.msra.mxu0 0.0
      %597 = vmatprep.subr.mxu0 0.0
      %598 = vmatpush1.msra.mxu0 0.0
      %599 = vmatprep.subr.mxu0 0.0
      %600 = vmatpush1.msra.mxu0 0.0
      %601 = vmatprep.subr.mxu0 0.0
      %602 = vmatpush1.msra.mxu0 0.0
      %603 = vmatprep.subr.mxu0 0.0
      %604 = vmatpush1.msra.mxu0 0.0
      %605 = vmatprep.subr.mxu0 0.0
      %606 = vmatpush1.msra.mxu0 0.0
      %607 = vmatprep.subr.mxu0 0.0
      %608 = vmatpush1.msra.mxu0 0.0
      %609 = vmatprep.subr.mxu0 0.0
      %610 = vmatpush1.msra.mxu0 0.0
      %611 = vmatprep.subr.mxu0 0.0
      %612 = vmatpush1.msra.mxu0 0.0
      %613 = vmatprep.subr.mxu0 0.0
      %614 = vmatpush1.msra.mxu0 0.0
      %v615 = vand.u32 %v419, 4294901760
      %v616 = vsub.f32 %v419, %v615
      %617 = vmatprep.subr.mxu0 %v616
      %v618 = vand.u32 %v418, 4294901760
      %v619 = vsub.f32 %v418, %v618
      %620 = vmatpush1.msra.mxu0 %v619
      %621 = vmatprep.subr.mxu0 0.0
      %622 = vmatpush2.msra.mxu0 0.0
      %623 = vmatprep.subr.mxu0 0.0
      %624 = vmatpush2.msra.mxu0 0.0
      %625 = vmatprep.subr.mxu0 0.0
      %626 = vmatpush2.msra.mxu0 0.0
      %627 = vmatprep.subr.mxu0 0.0
      %628 = vmatpush2.msra.mxu0 0.0
      %629 = vmatprep.subr.mxu0 0.0
      %630 = vmatpush2.msra.mxu0 0.0
      %631 = vmatprep.subr.mxu0 0.0
      %632 = vmatpush2.msra.mxu0 0.0
      %633 = vmatprep.subr.mxu0 0.0
      %634 = vmatpush2.msra.mxu0 0.0
      %635 = vmatprep.subr.mxu0 0.0
      %636 = vmatpush2.msra.mxu0 0.0
      %637 = vmatprep.subr.mxu0 0.0
      %638 = vmatpush2.msra.mxu0 0.0
      %639 = vmatprep.subr.mxu0 0.0
      %640 = vmatpush2.msra.mxu0 0.0
      %641 = vmatprep.subr.mxu0 0.0
      %642 = vmatpush2.msra.mxu0 0.0
      %643 = vmatprep.subr.mxu0 0.0
      %644 = vmatpush2.msra.mxu0 0.0
      %645 = vmatprep.subr.mxu0 0.0
      %646 = vmatpush2.msra.mxu0 0.0
      %647 = vmatprep.subr.mxu0 0.0
      %648 = vmatpush2.msra.mxu0 0.0
      %649 = vmatprep.subr.mxu0 0.0
      %650 = vmatpush2.msra.mxu0 0.0
      %651 = vmatprep.subr.mxu0 0.0
      %652 = vmatpush2.msra.mxu0 0.0
      %653 = vmatprep.mubr.f32.mxu0 0.0
      %v654 = vand.u32 %v423, 4294901760
      %v655 = vsub.f32 %v423, %v654
      %656 = vmatmul.mubr.f32.gmra.mxu0 %v655
      %v657 = vpop.f32.mrf.mxu0
      %v658 = vadd.f32 %v581, %v657
      %v659 = vpop.f32.mrf.mxu0
      %v660 = vadd.f32 %v583, %v659
      %661 = vdwg.mxu0
      %662 = vmatprep.subr.mxu0 0.0
      %663 = vmatpush1.msra.mxu0 0.0
      %664 = vmatprep.subr.mxu0 0.0
      %665 = vmatpush1.msra.mxu0 0.0
      %666 = vmatprep.subr.mxu0 0.0
      %667 = vmatpush1.msra.mxu0 0.0
      %668 = vmatprep.subr.mxu0 0.0
      %669 = vmatpush1.msra.mxu0 0.0
      %670 = vmatprep.subr.mxu0 0.0
      %671 = vmatpush1.msra.mxu0 0.0
      %672 = vmatprep.subr.mxu0 0.0
      %673 = vmatpush1.msra.mxu0 0.0
      %674 = vmatprep.subr.mxu0 0.0
      %675 = vmatpush1.msra.mxu0 0.0
      %676 = vmatprep.subr.mxu0 0.0
      %677 = vmatpush1.msra.mxu0 0.0
      %678 = vmatprep.subr.mxu0 0.0
      %679 = vmatpush1.msra.mxu0 0.0
      %680 = vmatprep.subr.mxu0 0.0
      %681 = vmatpush1.msra.mxu0 0.0
      %682 = vmatprep.subr.mxu0 0.0
      %683 = vmatpush1.msra.mxu0 0.0
      %684 = vmatprep.subr.mxu0 0.0
      %685 = vmatpush1.msra.mxu0 0.0
      %686 = vmatprep.subr.mxu0 0.0
      %687 = vmatpush1.msra.mxu0 0.0
      %688 = vmatprep.subr.mxu0 0.0
      %689 = vmatpush1.msra.mxu0 0.0
      %690 = vmatprep.subr.mxu0 0.0
      %691 = vmatpush1.msra.mxu0 0.0
      %v692 = vand.u32 %v419, 4294901760
      %693 = vmatprep.subr.mxu0 %v692
      %v694 = vand.u32 %v418, 4294901760
      %695 = vmatpush1.msra.mxu0 %v694
      %696 = vmatprep.subr.mxu0 0.0
      %697 = vmatpush2.msra.mxu0 0.0
      %698 = vmatprep.subr.mxu0 0.0
      %699 = vmatpush2.msra.mxu0 0.0
      %700 = vmatprep.subr.mxu0 0.0
      %701 = vmatpush2.msra.mxu0 0.0
      %702 = vmatprep.subr.mxu0 0.0
      %703 = vmatpush2.msra.mxu0 0.0
      %704 = vmatprep.subr.mxu0 0.0
      %705 = vmatpush2.msra.mxu0 0.0
      %706 = vmatprep.subr.mxu0 0.0
      %707 = vmatpush2.msra.mxu0 0.0
      %708 = vmatprep.subr.mxu0 0.0
      %709 = vmatpush2.msra.mxu0 0.0
      %710 = vmatprep.subr.mxu0 0.0
      %711 = vmatpush2.msra.mxu0 0.0
      %712 = vmatprep.subr.mxu0 0.0
      %713 = vmatpush2.msra.mxu0 0.0
      %714 = vmatprep.subr.mxu0 0.0
      %715 = vmatpush2.msra.mxu0 0.0
      %716 = vmatprep.subr.mxu0 0.0
      %717 = vmatpush2.msra.mxu0 0.0
      %718 = vmatprep.subr.mxu0 0.0
      %719 = vmatpush2.msra.mxu0 0.0
      %720 = vmatprep.subr.mxu0 0.0
      %721 = vmatpush2.msra.mxu0 0.0
      %722 = vmatprep.subr.mxu0 0.0
      %723 = vmatpush2.msra.mxu0 0.0
      %724 = vmatprep.subr.mxu0 0.0
      %725 = vmatpush2.msra.mxu0 0.0
      %726 = vmatprep.subr.mxu0 0.0
      %727 = vmatpush2.msra.mxu0 0.0
      %728 = vmatprep.mubr.f32.mxu0 0.0
      %v729 = vand.u32 %v423, 4294901760
      %v730 = vsub.f32 %v423, %v729
      %v731 = vand.u32 %v730, 4294901760
      %732 = vmatmul.mubr.f32.gmra.mxu0 %v731
      %v733 = vpop.f32.mrf.mxu0
      %v734 = vadd.f32 %v658, %v733
      %v735 = vpop.f32.mrf.mxu0
      %v736 = vadd.f32 %v660, %v735
      %737 = vdwg.mxu0
      %738 = vmatprep.subr.mxu0 0.0
      %739 = vmatpush1.msra.mxu0 0.0
      %740 = vmatprep.subr.mxu0 0.0
      %741 = vmatpush1.msra.mxu0 0.0
      %742 = vmatprep.subr.mxu0 0.0
      %743 = vmatpush1.msra.mxu0 0.0
      %744 = vmatprep.subr.mxu0 0.0
      %745 = vmatpush1.msra.mxu0 0.0
      %746 = vmatprep.subr.mxu0 0.0
      %747 = vmatpush1.msra.mxu0 0.0
      %748 = vmatprep.subr.mxu0 0.0
      %749 = vmatpush1.msra.mxu0 0.0
      %750 = vmatprep.subr.mxu0 0.0
      %751 = vmatpush1.msra.mxu0 0.0
      %752 = vmatprep.subr.mxu0 0.0
      %753 = vmatpush1.msra.mxu0 0.0
      %754 = vmatprep.subr.mxu0 0.0
      %755 = vmatpush1.msra.mxu0 0.0
      %756 = vmatprep.subr.mxu0 0.0
      %757 = vmatpush1.msra.mxu0 0.0
      %758 = vmatprep.subr.mxu0 0.0
      %759 = vmatpush1.msra.mxu0 0.0
      %760 = vmatprep.subr.mxu0 0.0
      %761 = vmatpush1.msra.mxu0 0.0
      %762 = vmatprep.subr.mxu0 0.0
      %763 = vmatpush1.msra.mxu0 0.0
      %764 = vmatprep.subr.mxu0 0.0
      %765 = vmatpush1.msra.mxu0 0.0
      %766 = vmatprep.subr.mxu0 0.0
      %767 = vmatpush1.msra.mxu0 0.0
      %v768 = vand.u32 %v419, 4294901760
      %v769 = vsub.f32 %v419, %v768
      %v770 = vand.u32 %v769, 4294901760
      %771 = vmatprep.subr.mxu0 %v770
      %v772 = vand.u32 %v418, 4294901760
      %v773 = vsub.f32 %v418, %v772
      %v774 = vand.u32 %v773, 4294901760
      %775 = vmatpush1.msra.mxu0 %v774
      %776 = vmatprep.subr.mxu0 0.0
      %777 = vmatpush2.msra.mxu0 0.0
      %778 = vmatprep.subr.mxu0 0.0
      %779 = vmatpush2.msra.mxu0 0.0
      %780 = vmatprep.subr.mxu0 0.0
      %781 = vmatpush2.msra.mxu0 0.0
      %782 = vmatprep.subr.mxu0 0.0
      %783 = vmatpush2.msra.mxu0 0.0
      %784 = vmatprep.subr.mxu0 0.0
      %785 = vmatpush2.msra.mxu0 0.0
      %786 = vmatprep.subr.mxu0 0.0
      %787 = vmatpush2.msra.mxu0 0.0
      %788 = vmatprep.subr.mxu0 0.0
      %789 = vmatpush2.msra.mxu0 0.0
      %790 = vmatprep.subr.mxu0 0.0
      %791 = vmatpush2.msra.mxu0 0.0
      %792 = vmatprep.subr.mxu0 0.0
      %793 = vmatpush2.msra.mxu0 0.0
      %794 = vmatprep.subr.mxu0 0.0
      %795 = vmatpush2.msra.mxu0 0.0
      %796 = vmatprep.subr.mxu0 0.0
      %797 = vmatpush2.msra.mxu0 0.0
      %798 = vmatprep.subr.mxu0 0.0
      %799 = vmatpush2.msra.mxu0 0.0
      %800 = vmatprep.subr.mxu0 0.0
      %801 = vmatpush2.msra.mxu0 0.0
      %802 = vmatprep.subr.mxu0 0.0
      %803 = vmatpush2.msra.mxu0 0.0
      %804 = vmatprep.subr.mxu0 0.0
      %805 = vmatpush2.msra.mxu0 0.0
      %806 = vmatprep.subr.mxu0 0.0
      %807 = vmatpush2.msra.mxu0 0.0
      %808 = vmatprep.mubr.f32.mxu0 0.0
      %v809 = vand.u32 %v423, 4294901760
      %810 = vmatmul.mubr.f32.gmra.mxu0 %v809
      %v811 = vpop.f32.mrf.mxu0
      %v812 = vadd.f32 %v734, %v811
      %v813 = vpop.f32.mrf.mxu0
      %v814 = vadd.f32 %v736, %v813
      %815 = vdwg.mxu0
      %816 = vmatprep.subr.mxu0 0.0
      %817 = vmatpush1.msra.mxu0 0.0
      %818 = vmatprep.subr.mxu0 0.0
      %819 = vmatpush1.msra.mxu0 0.0
      %820 = vmatprep.subr.mxu0 0.0
      %821 = vmatpush1.msra.mxu0 0.0
      %822 = vmatprep.subr.mxu0 0.0
      %823 = vmatpush1.msra.mxu0 0.0
      %824 = vmatprep.subr.mxu0 0.0
      %825 = vmatpush1.msra.mxu0 0.0
      %826 = vmatprep.subr.mxu0 0.0
      %827 = vmatpush1.msra.mxu0 0.0
      %828 = vmatprep.subr.mxu0 0.0
      %829 = vmatpush1.msra.mxu0 0.0
      %830 = vmatprep.subr.mxu0 0.0
      %831 = vmatpush1.msra.mxu0 0.0
      %832 = vmatprep.subr.mxu0 0.0
      %833 = vmatpush1.msra.mxu0 0.0
      %834 = vmatprep.subr.mxu0 0.0
      %835 = vmatpush1.msra.mxu0 0.0
      %836 = vmatprep.subr.mxu0 0.0
      %837 = vmatpush1.msra.mxu0 0.0
      %838 = vmatprep.subr.mxu0 0.0
      %839 = vmatpush1.msra.mxu0 0.0
      %840 = vmatprep.subr.mxu0 0.0
      %841 = vmatpush1.msra.mxu0 0.0
      %842 = vmatprep.subr.mxu0 0.0
      %843 = vmatpush1.msra.mxu0 0.0
      %844 = vmatprep.subr.mxu0 0.0
      %845 = vmatpush1.msra.mxu0 0.0
      %v846 = vand.u32 %v419, 4294901760
      %847 = vmatprep.subr.mxu0 %v846
      %v848 = vand.u32 %v418, 4294901760
      %849 = vmatpush1.msra.mxu0 %v848
      %850 = vmatprep.subr.mxu0 0.0
      %851 = vmatpush2.msra.mxu0 0.0
      %852 = vmatprep.subr.mxu0 0.0
      %853 = vmatpush2.msra.mxu0 0.0
      %854 = vmatprep.subr.mxu0 0.0
      %855 = vmatpush2.msra.mxu0 0.0
      %856 = vmatprep.subr.mxu0 0.0
      %857 = vmatpush2.msra.mxu0 0.0
      %858 = vmatprep.subr.mxu0 0.0
      %859 = vmatpush2.msra.mxu0 0.0
      %860 = vmatprep.subr.mxu0 0.0
      %861 = vmatpush2.msra.mxu0 0.0
      %862 = vmatprep.subr.mxu0 0.0
      %863 = vmatpush2.msra.mxu0 0.0
      %864 = vmatprep.subr.mxu0 0.0
      %865 = vmatpush2.msra.mxu0 0.0
      %866 = vmatprep.subr.mxu0 0.0
      %867 = vmatpush2.msra.mxu0 0.0
      %868 = vmatprep.subr.mxu0 0.0
      %869 = vmatpush2.msra.mxu0 0.0
      %870 = vmatprep.subr.mxu0 0.0
      %871 = vmatpush2.msra.mxu0 0.0
      %872 = vmatprep.subr.mxu0 0.0
      %873 = vmatpush2.msra.mxu0 0.0
      %874 = vmatprep.subr.mxu0 0.0
      %875 = vmatpush2.msra.mxu0 0.0
      %876 = vmatprep.subr.mxu0 0.0
      %877 = vmatpush2.msra.mxu0 0.0
      %878 = vmatprep.subr.mxu0 0.0
      %879 = vmatpush2.msra.mxu0 0.0
      %880 = vmatprep.subr.mxu0 0.0
      %881 = vmatpush2.msra.mxu0 0.0
      %882 = vmatprep.mubr.f32.mxu0 0.0
      %v883 = vand.u32 %v423, 4294901760
      %884 = vmatmul.mubr.f32.gmra.mxu0 %v883
      %v885 = vpop.f32.mrf.mxu0
      %v886 = vadd.f32 %v812, %v885
      %v887 = vpop.f32.mrf.mxu0
      %v888 = vadd.f32 %v814, %v887
      %889 = vdwg.mxu0
      %v892 = vcombine.low %v886, %v888
      %894 = vst [vmem:[%s275] sm:$0xff] %v892
      %v895 = vcombine.low %v404, %v413
      %v897 = vunpack.c.l.s4 1966171168
      %v898 = vunpack.c.0.s8 %v897
      %v899 = vlaneseq
      %v900 = vshrl.u32 %v899, 7
      %v901 = vsub.s32 %v898, %v900
      %v902 = vrot.slane %v895, %v901
      %v904 = vunpack.c.l.s4 1966171168
      %v905 = vunpack.c.0.s8 %v904
      %v906 = vlaneseq
      %v907 = vshrl.u32 %v906, 7
      %v908 = vsub.s32 %v905, %v907
      %v909 = vrot.slane %v902, %v908
      %v910 = vlaneseq
      %vm911 = vcmp.ge.s32.totalorder %v910, 0
      %vm912 = vcmp.lt.s32.totalorder %v910, 256
      %vm913 = vmand %vm911, %vm912
      %914 = vst.msk [vmem:[%s284] sm:$0x3] %vm913, %v909
      %s915 = smul.u32 2, %s22
      %p916 = scmp.lt.s32.totalorder %s21, 1
      %s917 = scalar_select %p916, %s21, 1
      %p918 = scmp.lt.s32.totalorder %s915, 1
      %s919 = scalar_select %p918, %s915, 1
      %s920 = smul.addr %s917, 2
      %s921 = sadd.s32 %s919, %s920
      %s922 = smul.addr %s921, 4
      %s923 = scalar_lea.vmem %s4, %s922
      %s924 = smul.u32 2, %s22
      %p925 = scmp.lt.s32.totalorder %s21, 1
      %s926 = scalar_select %p925, %s21, 1
      %p927 = scmp.lt.s32.totalorder %s924, 1
      %s928 = scalar_select %p927, %s924, 1
      %s929 = smul.addr %s926, 2
      %s930 = sadd.s32 %s928, %s929
      %s931 = scalar_lea.vmem %s5, %s930
      // Predicated region
      $region37: #{nearest_embed_forward.1} parent=35 // pred_check
        %p932 = pneg %p140
      $region38: #{nearest_embed_forward.1} parent=35 // pred_check_branch
        %934 = sbr.rel (%p932) target = $region40
      $region39: #{nearest_embed_forward.1} parent=35 // pred_region
        %s935 = smul.u32 2, %s22
      $region40: #{nearest_embed_forward.1} parent=35 // pred_fallthru
        _
      // Predicated region
      $region41: #{nearest_embed_forward.1} parent=35 // pred_check
        %p936 = pneg %p168
      $region42: #{nearest_embed_forward.1} parent=35 // pred_check_branch
        %938 = sbr.rel (%p936) target = $region44
      $region43: #{nearest_embed_forward.1} parent=35 // pred_region
        %s939 = smul.u32 2, %s22
      $region44: #{nearest_embed_forward.1} parent=35 // pred_fallthru
        _
    $region36: #{nearest_embed_forward.1} parent=5 // pred_fallthru
      _
    %p940 = scmp.le.s32.totalorder 2, %s12
    // Predicated region
    $region45: #{nearest_embed_forward.1} parent=5 // pred_check
      %p941 = pneg %p940
    $region46: #{nearest_embed_forward.1} parent=5 // pred_check_branch
      %943 = sbr.rel (%p941) target = $region48
    $region47: #{nearest_embed_forward.1} parent=5 // pred_region
      %s944 = ssub.s32 %s12, 2
      // Predicated region
      $region49: #{nearest_embed_forward.1} parent=47 // pred_check
        %p945 = pneg %p146
      $region50: #{nearest_embed_forward.1} parent=47 // pred_check_branch
        %947 = sbr.rel (%p945) target = $region52
      $region51: #{nearest_embed_forward.1} parent=47 // pred_region
        %s948 = smul.u32 2, %s24
        %p949 = scmp.lt.s32.totalorder %s23, 1
        %s950 = scalar_select %p949, %s23, 1
        %p951 = scmp.lt.s32.totalorder %s948, 1
        %s952 = scalar_select %p951, %s948, 1
        %s953 = smul.addr %s950, 2
        %s954 = sadd.s32 %s952, %s953
        %s955 = smul.addr %s954, 4
        %s956 = scalar_lea.vmem %s4, %s955
      $region52: #{nearest_embed_forward.1} parent=47 // pred_fallthru
        _
      // Predicated region
      $region53: #{nearest_embed_forward.1} parent=47 // pred_check
        %p957 = pneg %p174
      $region54: #{nearest_embed_forward.1} parent=47 // pred_check_branch
        %959 = sbr.rel (%p957) target = $region56
      $region55: #{nearest_embed_forward.1} parent=47 // pred_region
        %s960 = smul.u32 2, %s24
        %p961 = scmp.lt.s32.totalorder %s23, 1
        %s962 = scalar_select %p961, %s23, 1
        %p963 = scmp.lt.s32.totalorder %s960, 1
        %s964 = scalar_select %p963, %s960, 1
        %s965 = smul.addr %s962, 2
        %s966 = sadd.s32 %s964, %s965
        %s967 = scalar_lea.vmem %s5, %s966
      $region56: #{nearest_embed_forward.1} parent=47 // pred_fallthru
        _
    $region48: #{nearest_embed_forward.1} parent=5 // pred_fallthru
      _
  $region6: #{nearest_embed_forward.1} parent=0 // loop_footer
    %s16 = sadd.s32 1, %s12
  $region7: #{nearest_embed_forward.1} parent=0 // loop_footer_branch
    %11 = sbr.rel target = $region3
  $region8: #{nearest_embed_forward.1} parent=0 // loop_exit
    _

</llo_original>
